<compile_context>
chip_gen: v5e
topology: v5e:2x2
jax: 0.10.0
libtpu: 0.0.40
codegen_flags: <defaults>
</compile_context>

<pallas_src>
import functools

import jax
import jax.numpy as jnp
from jax.experimental import pallas as pl
from jax.experimental.pallas import tpu as pltpu

_LANE = 128
_SUBLANE = 8


def _round_up(x, m):
    return (x + m - 1) // m * m


# --------------------------------------------------------------------------
# Kernels
# --------------------------------------------------------------------------
def _matmul_bias_kernel(x_ref, s_ref, w_ref, b_ref, o_ref, acc_ref, *,
                        d, block_k, need_mask, compute_dtype):
    # x_ref: (TB, TK)  s_ref: (1, TK)  w_ref: (TK, Lp)  b_ref: (1, Lp)
    # o_ref: (TB, Lp)  acc_ref: (TB, Lp) f32
    k = pl.program_id(1)

    @pl.when(k == 0)
    def _():
        acc_ref[...] = jnp.zeros_like(acc_ref)

    # Per-tile BN scale on the VPU (ones when BN is disabled) — hidden under
    # the MXU / DMA work.
    xs = x_ref[...].astype(jnp.float32) * s_ref[...].astype(jnp.float32)
    if need_mask:
        # Last K tile may extend past D: zero junk columns before the matmul.
        cols = jax.lax.broadcasted_iota(jnp.int32, xs.shape, 1) + k * block_k
        xs = jnp.where(cols < d, xs, 0.0)
    if compute_dtype is not None:
        # In-kernel cast (HBM feed stays at x's native width).
        xs = xs.astype(compute_dtype)

    acc_ref[...] += jnp.dot(xs, w_ref[...], preferred_element_type=jnp.float32)

    @pl.when(k == pl.num_programs(1) - 1)
    def _():
        o_ref[...] = (acc_ref[...] + b_ref[...].astype(jnp.float32)
                      ).astype(o_ref.dtype)


def _bn_stats_kernel(x_ref, shift_ref, sum_ref, sumsq_ref, *, batch, block_b):
    # Shifted sums over the batch grid axis (shift = x[0]) to avoid
    # E[x^2] - E[x]^2 cancellation.
    i = pl.program_id(0)

    @pl.when(i == 0)
    def _():
        sum_ref[...] = jnp.zeros_like(sum_ref)
        sumsq_ref[...] = jnp.zeros_like(sumsq_ref)

    xc = x_ref[...].astype(jnp.float32) - shift_ref[...].astype(jnp.float32)
    rows = jax.lax.broadcasted_iota(jnp.int32, xc.shape, 0) + i * block_b
    xc = jnp.where(rows < batch, xc, 0.0)   # mask junk rows of partial tiles

    sum_ref[...] += jnp.sum(xc, axis=0, keepdims=True)
    sumsq_ref[...] += jnp.sum(xc * xc, axis=0, keepdims=True)


# --------------------------------------------------------------------------
# Sizing helpers
# --------------------------------------------------------------------------
def _vmem_budget():
    """(physical VMEM, tile budget, scoped vmem_limit_bytes) per generation."""
    cap = 64 << 20                      # conservative default (v7x per-core)
    try:
        info = pltpu.get_tpu_info()
        cap = int(getattr(info, "vmem_capacity_bytes", cap))
    except Exception:
        pass
    budget = max(16 << 20, cap // 2 - (4 << 20))
    limit = min(cap, budget + (16 << 20))
    return cap, budget, int(limit)


def _select_tiles(batch, d, lp, x_item, w_item, out_item, budget, max_tile,
                  max_block_k=None):
    """Pick (batch tile, K tile, #K steps, padded D) so the working set fits."""
    cap = min(max_tile, batch)
    if cap < batch:
        cap = max(_SUBLANE, cap - cap % _SUBLANE)

    def footprint(tb, tk, nk):
        w_bufs = 1 if nk == 1 else 2          # invariant weight: single buffer
        return (2 * tb * tk * x_item                      # streamed x tiles
                + w_bufs * tk * (lp * w_item + 4)         # weight (+ scale row)
                + lp * 4                                  # bias
                + 2 * tb * lp * out_item                  # streamed out tiles
                + tb * lp * 4)                            # f32 accumulator

    def best_tb(tk, nk):
        tb = cap
        while tb > _SUBLANE and footprint(tb, tk, nk) > budget:
            tb = max(_SUBLANE, (tb - 1) // _SUBLANE * _SUBLANE)
        return tb

    configs = []
    if max_block_k is None or max_block_k >= d:
        configs.append((best_tb(d, 1), d, 1))             # whole D resident
    for tk in (2048, 1024, 512, 256, 128):                # lane-aligned K tiles
        if tk >= d or (max_block_k is not None and tk > max_block_k):
            continue
        nk = pl.cdiv(d, tk)
        configs.append((best_tb(tk, nk), tk, nk))
    if not configs:
        configs.append((best_tb(d, 1), d, 1))

    target_tb = min(256, cap)
    tb, tk, nk = max(configs,
                     key=lambda c: (footprint(*c) <= budget,
                                    min(c[0], target_tb), -c[2], c[0]))
    return tb, tk, nk, tk * nk


def _pick_stats_tile(batch, d, x_item, budget):
    """Stats pass only streams x, so it can use a much larger batch tile."""
    if batch <= _SUBLANE:
        return batch
    tb = min(2048, _round_up(batch, _SUBLANE))
    while tb > _SUBLANE and 2 * tb * d * x_item > budget:
        tb -= _SUBLANE
    return batch if tb >= batch else tb


# --------------------------------------------------------------------------
# Wrappers
# --------------------------------------------------------------------------
def prepare_params(weight, bias, *, d_pad=None, compute_dtype=None):
    """One-time pad + K-major transpose of the Linear params.

    In production this is hoisted to module init (weight: (L, D), bias: (L,)).
    Returns w_t: (d_pad, Lp) and bias: (1, Lp), Lp = roundup(L, 128).
    """
    num_labels, d = weight.shape
    lp = _round_up(num_labels, _LANE)
    if d_pad is None:
        d_pad = d
    w_dtype = jnp.float32 if compute_dtype is None else compute_dtype
    w_t = jnp.pad(weight.astype(w_dtype).T,
                  ((0, d_pad - d), (0, lp - num_labels)))
    b_pad = jnp.pad(bias.astype(jnp.float32),
                    (0, lp - num_labels)).reshape(1, lp)
    return w_t, b_pad


def _batch_stats(x, block_b, vmem_limit_bytes):
    """Full-batch per-feature mean / biased variance (training-mode BN)."""
    batch, d = x.shape
    nb = pl.cdiv(batch, block_b)
    shift = x[:1].astype(jnp.float32)                         # (1, D) shift row
    kernel = functools.partial(_bn_stats_kernel, batch=batch, block_b=block_b)
    s, ss = pl.pallas_call(
        kernel,
        out_shape=(jax.ShapeDtypeStruct((1, d), jnp.float32),
                   jax.ShapeDtypeStruct((1, d), jnp.float32)),
        grid=(nb,),
        in_specs=[pl.BlockSpec((block_b, d), lambda i: (i, 0)),
                  pl.BlockSpec((1, d), lambda i: (0, 0))],
        out_specs=(pl.BlockSpec((1, d), lambda i: (0, 0)),
                   pl.BlockSpec((1, d), lambda i: (0, 0))),
        # TODO(synk): shard this streaming reduction across both v7x
        # TensorCores (leading parallel axis of size 2, per-core partial sums).
        compiler_params=pltpu.CompilerParams(
            dimension_semantics=("arbitrary",),
            vmem_limit_bytes=vmem_limit_bytes),
    )(x, shift)
    inv_n = 1.0 / jnp.float32(batch)
    mean_c = s * inv_n
    mean = shift + mean_c
    var = ss * inv_n - mean_c * mean_c      # biased variance (training-mode BN)
    return mean, var


def linear_classifier(x, weight, bias, *, apply_bn=False, eps=1e-6,
                      block_b=None, stats_block_b=None, compute_dtype=None,
                      max_block_k=None, prepared=None):
    """x: (B, D); weight: (L, D) [PyTorch Linear layout]; bias: (L,)."""
    batch, d = x.shape
    num_labels = weight.shape[0]
    lp = _round_up(num_labels, _LANE)

    cap, budget, vmem_limit = _vmem_budget()
    # Bigger batch tiles on 128 MiB-VMEM parts (v5e/v6e); v7x (64 MiB) keeps 512.
    max_tile = 1024 if cap >= (96 << 20) else 512
    if block_b is not None:
        max_tile = min(max_tile, block_b)

    x_item = jnp.dtype(x.dtype).itemsize
    w_item = 4 if compute_dtype is None else jnp.dtype(compute_dtype).itemsize
    tb, tk, nk, d_pad = _select_tiles(batch, d, lp, x_item, w_item, x_item,
                                      budget, max_tile, max_block_k)

    if prepared is None:
        # TODO(synk): hoist prepare_params (one-time pad + transpose) out of the
        # per-call path for repeated classifier invocations.
        w_t, b_pad = prepare_params(weight, bias, d_pad=d_pad,
                                    compute_dtype=compute_dtype)
    else:
        w_t, b_pad = prepared

    if apply_bn:
        # Training-mode batch statistics; inv_std is applied per x tile in the
        # kernel (weight never rewritten in HBM), only the bias correction is
        # precomputed:  y = (x*inv_std) @ W^T + (b - (mean*inv_std) @ W^T)
        sb = stats_block_b if stats_block_b is not None else \
            _pick_stats_tile(batch, d, x_item, budget)
        mean, var = _batch_stats(x, sb, vmem_limit)
        inv_std = jax.lax.rsqrt(var + eps)                           # (1, D)
        scale = inv_std
        corr = (mean * inv_std) @ weight.astype(jnp.float32).T       # (1, L)
        b_eff = b_pad - jnp.pad(corr, ((0, 0), (0, lp - num_labels)))
    else:
        scale = jnp.ones((1, d), jnp.float32)
        b_eff = b_pad

    if d_pad > d:
        scale = jnp.pad(scale, ((0, 0), (0, d_pad - d)))

    kernel = functools.partial(
        _matmul_bias_kernel, d=d, block_k=tk,
        need_mask=(d_pad != d), compute_dtype=compute_dtype)

    def run(single_buffer_invariants):
        def spec(shape, index_map, invariant):
            if invariant and single_buffer_invariants:
                return pl.BlockSpec(shape, index_map,
                                    pipeline_mode=pl.Buffered(1))
            return pl.BlockSpec(shape, index_map)

        return pl.pallas_call(
            kernel,
            out_shape=jax.ShapeDtypeStruct((batch, lp), x.dtype),
            grid=(pl.cdiv(batch, tb), nk),
            in_specs=[
                spec((tb, tk), lambda i, k: (i, k), False),      # x stream
                spec((1, tk), lambda i, k: (0, k), nk == 1),     # inv_std / ones
                spec((tk, lp), lambda i, k: (k, 0), nk == 1),    # W (K-major)
                spec((1, lp), lambda i, k: (0, 0), True),        # bias
            ],
            out_specs=pl.BlockSpec((tb, lp), lambda i, k: (i, 0)),
            scratch_shapes=[pltpu.VMEM((tb, lp), jnp.float32)],
            compiler_params=pltpu.CompilerParams(
                dimension_semantics=("parallel", "arbitrary"),
                vmem_limit_bytes=vmem_limit),
        )(x, scale, w_t, b_eff)

    try:
        out = run(True)    # single-buffer the loop-invariant operands
    except Exception:
        out = run(False)   # robust fallback: default double-buffering

    return out[:, :num_labels]


# --------------------------------------------------------------------------
# Reference (faithful to the PyTorch module's forward in training mode)
# --------------------------------------------------------------------------
def _reference(x, weight, bias, *, apply_bn, eps=1e-6):
    x = x.astype(jnp.float32)
    if apply_bn:
        mean = jnp.mean(x, axis=0, keepdims=True)
        var = jnp.mean((x - mean) ** 2, axis=0, keepdims=True)
        x = (x - mean) / jnp.sqrt(var + eps)
    return x @ weight.T + bias


if __name__ == "__main__":
    key = jax.random.PRNGKey(0)
    keys = jax.random.split(key, 7)

    def make_params(kw, kb, num_labels, input_dim):
        bound = 1.0 / jnp.sqrt(jnp.float32(input_dim))
        w = jax.random.uniform(kw, (num_labels, input_dim), jnp.float32,
                               minval=-bound, maxval=bound)
        b = jax.random.uniform(kb, (num_labels,), jnp.float32,
                               minval=-bound, maxval=bound)
        return w, b

    def check(out, ref, shape, tol=1e-4):
        assert out.shape == shape, (out.shape, shape)
        err = float(jnp.max(jnp.abs(out - ref)))
        assert jnp.allclose(out, ref, atol=tol, rtol=tol), err

    # --- small single-tile case (batch=8, D=32, L=10) -----------------------
    batch, input_dim, num_labels = 8, 32, 10
    x = jax.random.normal(keys[0], (batch, input_dim), jnp.float32)
    weight, bias = make_params(keys[1], keys[2], num_labels, input_dim)
    for bn in (False, True):
        out = jax.block_until_ready(
            linear_classifier(x, weight, bias, apply_bn=bn))
        check(out, _reference(x, weight, bias, apply_bn=bn),
              (batch, num_labels))

    # --- multi-tile batch grid with a partial trailing batch tile -----------
    batch2 = 40
    x2 = jax.random.normal(keys[3], (batch2, input_dim), jnp.float32)
    for bn in (False, True):
        out = jax.block_until_ready(
            linear_classifier(x2, weight, bias, apply_bn=bn,
                              block_b=16, stats_block_b=16))
        check(out, _reference(x2, weight, bias, apply_bn=bn),
              (batch2, num_labels))

    # --- forced K-tiling over D (accumulator + masked partial K tile) -------
    batch3, input_dim3, num_labels3 = 16, 200, 10
    x3 = jax.random.normal(keys[4], (batch3, input_dim3), jnp.float32)
    w3, b3 = make_params(keys[5], keys[6], num_labels3, input_dim3)
    for bn in (False, True):
        out = jax.block_until_ready(
            linear_classifier(x3, w3, b3, apply_bn=bn, max_block_k=128))
        check(out, _reference(x3, w3, b3, apply_bn=bn),
              (batch3, num_labels3))

    print("KERNEL_OK")
</pallas_src>

<mosaic_0001>
module attributes {stable_mosaic.version = 11 : i64} {
  func.func @_matmul_bias_kernel(%arg0: i32, %arg1: i32, %arg2: memref<8x32xf32, #tpu.memory_space<vmem>>, %arg3: memref<1x32xf32, #tpu.memory_space<vmem>>, %arg4: memref<32x128xf32, #tpu.memory_space<vmem>>, %arg5: memref<1x128xf32, #tpu.memory_space<vmem>>, %arg6: memref<8x128xf32, #tpu.memory_space<vmem>>, %arg7: memref<8x128xf32, #tpu.memory_space<vmem>>) attributes {dimension_semantics = [#tpu.dimension_semantics<parallel>, #tpu.dimension_semantics<arbitrary>], iteration_bounds = array<i64: 1, 1>, scalar_prefetch = 0 : i64, scratch_operands = 1 : i64, tpu.core_type = #tpu.core_type<tc>, window_params = [{transform_indices = @transform_0, window_bounds = array<i64: 8, 32>}, {pipeline_mode = #tpu.pipeline_mode<synchronous>, transform_indices = @transform_1, window_bounds = array<i64: 1, 32>}, {pipeline_mode = #tpu.pipeline_mode<synchronous>, transform_indices = @transform_2, window_bounds = array<i64: 32, 128>}, {pipeline_mode = #tpu.pipeline_mode<synchronous>, transform_indices = @transform_3, window_bounds = array<i64: 1, 128>}, {transform_indices = @transform_4, window_bounds = array<i64: 8, 128>}]} {
    %c0_i32 = arith.constant 0 : i32
    %0 = arith.cmpi eq, %arg1, %c0_i32 : i32
    %1 = arith.extui %0 : i1 to i32
    %c0_i32_0 = arith.constant 0 : i32
    %2 = arith.cmpi ne, %1, %c0_i32_0 : i32
    scf.if %2 {
      %cst_12 = arith.constant 0.000000e+00 : f32
      %15 = vector.broadcast %cst_12 : f32 to vector<8x128xf32>
      %c0_13 = arith.constant 0 : index
      %c0_14 = arith.constant 0 : index
      %16 = vector.load %arg7[%c0_13, %c0_14] : memref<8x128xf32, #tpu.memory_space<vmem>>, vector<8x128xf32>
      tpu.vector_store %arg7[%c0_13, %c0_14], %15 {strides = array<i32>} : memref<8x128xf32, #tpu.memory_space<vmem>>, vector<8x128xf32>,
    } else {
    }
    %c0 = arith.constant 0 : index
    %c0_1 = arith.constant 0 : index
    %3 = vector.load %arg2[%c0, %c0_1] : memref<8x32xf32, #tpu.memory_space<vmem>>, vector<8x32xf32>
    %c0_2 = arith.constant 0 : index
    %c0_3 = arith.constant 0 : index
    %4 = vector.load %arg3[%c0_2, %c0_3] : memref<1x32xf32, #tpu.memory_space<vmem>>, vector<1x32xf32>
    %5 = vector.broadcast %4 : vector<1x32xf32> to vector<8x32xf32>
    %6 = arith.mulf %3, %5 : vector<8x32xf32>
    %c0_4 = arith.constant 0 : index
    %c0_5 = arith.constant 0 : index
    %7 = vector.load %arg7[%c0_4, %c0_5] : memref<8x128xf32, #tpu.memory_space<vmem>>, vector<8x128xf32>
    %c0_6 = arith.constant 0 : index
    %c0_7 = arith.constant 0 : index
    %8 = vector.load %arg4[%c0_6, %c0_7] : memref<32x128xf32, #tpu.memory_space<vmem>>, vector<32x128xf32>
    %cst = arith.constant dense<0.000000e+00> : vector<8x128xf32>
    %9 = tpu.matmul %6, %8, %cst {dimension_numbers = #tpu.dot_dimension_numbers<[1], [0], [0], [1], [0, 0, 1, 1], [], []>} : vector<8x32xf32>, vector<32x128xf32>, vector<8x128xf32> -> vector<8x128xf32>
    %10 = arith.addf %7, %9 : vector<8x128xf32>
    %c0_8 = arith.constant 0 : index
    %c0_9 = arith.constant 0 : index
    %11 = vector.load %arg7[%c0_8, %c0_9] : memref<8x128xf32, #tpu.memory_space<vmem>>, vector<8x128xf32>
    tpu.vector_store %arg7[%c0_8, %c0_9], %10 {strides = array<i32>} : memref<8x128xf32, #tpu.memory_space<vmem>>, vector<8x128xf32>,
    %c0_i32_10 = arith.constant 0 : i32
    %12 = arith.cmpi eq, %arg1, %c0_i32_10 : i32
    %13 = arith.extui %12 : i1 to i32
    %c0_i32_11 = arith.constant 0 : i32
    %14 = arith.cmpi ne, %13, %c0_i32_11 : i32
    scf.if %14 {
      %c0_12 = arith.constant 0 : index
      %c0_13 = arith.constant 0 : index
      %15 = vector.load %arg7[%c0_12, %c0_13] : memref<8x128xf32, #tpu.memory_space<vmem>>, vector<8x128xf32>
      %c0_14 = arith.constant 0 : index
      %c0_15 = arith.constant 0 : index
      %16 = vector.load %arg5[%c0_14, %c0_15] : memref<1x128xf32, #tpu.memory_space<vmem>>, vector<1x128xf32>
      %17 = vector.broadcast %16 : vector<1x128xf32> to vector<8x128xf32>
      %18 = arith.addf %15, %17 : vector<8x128xf32>
      %c0_16 = arith.constant 0 : index
      %c0_17 = arith.constant 0 : index
      %19 = vector.load %arg6[%c0_16, %c0_17] : memref<8x128xf32, #tpu.memory_space<vmem>>, vector<8x128xf32>
      tpu.vector_store %arg6[%c0_16, %c0_17], %18 {strides = array<i32>} : memref<8x128xf32, #tpu.memory_space<vmem>>, vector<8x128xf32>,
    } else {
    }
    return
  }
  func.func @transform_0(%arg0: i32, %arg1: i32) -> (i32, i32) {
    %c0_i32 = arith.constant 0 : i32
    return %arg0, %arg1 : i32, i32
  }
  func.func @transform_1(%arg0: i32, %arg1: i32) -> (i32, i32) {
    %c0_i32 = arith.constant 0 : i32
    %c0_i32_0 = arith.constant 0 : i32
    return %c0_i32, %arg1 : i32, i32
  }
  func.func @transform_2(%arg0: i32, %arg1: i32) -> (i32, i32) {
    %c0_i32 = arith.constant 0 : i32
    %c0_i32_0 = arith.constant 0 : i32
    return %arg1, %c0_i32 : i32, i32
  }
  func.func @transform_3(%arg0: i32, %arg1: i32) -> (i32, i32) {
    %c0_i32 = arith.constant 0 : i32
    %c0_i32_0 = arith.constant 0 : i32
    %c0_i32_1 = arith.constant 0 : i32
    return %c0_i32, %c0_i32_0 : i32, i32
  }
  func.func @transform_4(%arg0: i32, %arg1: i32) -> (i32, i32) {
    %c0_i32 = arith.constant 0 : i32
    %c0_i32_0 = arith.constant 0 : i32
    return %arg0, %c0_i32 : i32, i32
  }
}

module attributes {stable_mosaic.version = 11 : i64} {
  func.func @_matmul_bias_kernel(%arg0: i32, %arg1: i32, %arg2: memref<8x32xf32, #tpu.memory_space<vmem>>, %arg3: memref<1x32xf32, #tpu.memory_space<vmem>>, %arg4: memref<32x128xf32, #tpu.memory_space<vmem>>, %arg5: memref<1x128xf32, #tpu.memory_space<vmem>>, %arg6: memref<8x128xf32, #tpu.memory_space<vmem>>, %arg7: memref<8x128xf32, #tpu.memory_space<vmem>>) attributes {dimension_semantics = [#tpu.dimension_semantics<parallel>, #tpu.dimension_semantics<arbitrary>], iteration_bounds = array<i64: 1, 1>, scalar_prefetch = 0 : i64, scratch_operands = 1 : i64, tpu.core_type = #tpu.core_type<tc>, window_params = [{transform_indices = @transform_0, window_bounds = array<i64: 8, 32>}, {transform_indices = @transform_1, window_bounds = array<i64: 1, 32>}, {transform_indices = @transform_2, window_bounds = array<i64: 32, 128>}, {pipeline_mode = #tpu.pipeline_mode<synchronous>, transform_indices = @transform_3, window_bounds = array<i64: 1, 128>}, {transform_indices = @transform_4, window_bounds = array<i64: 8, 128>}]} {
    %c0_i32 = arith.constant 0 : i32
    %0 = arith.cmpi eq, %arg1, %c0_i32 : i32
    %1 = arith.extui %0 : i1 to i32
    %c0_i32_0 = arith.constant 0 : i32
    %2 = arith.cmpi ne, %1, %c0_i32_0 : i32
    scf.if %2 {
      %cst_12 = arith.constant 0.000000e+00 : f32
      %15 = vector.broadcast %cst_12 : f32 to vector<8x128xf32>
      %c0_13 = arith.constant 0 : index
      %c0_14 = arith.constant 0 : index
      %16 = vector.load %arg7[%c0_13, %c0_14] : memref<8x128xf32, #tpu.memory_space<vmem>>, vector<8x128xf32>
      tpu.vector_store %arg7[%c0_13, %c0_14], %15 {strides = array<i32>} : memref<8x128xf32, #tpu.memory_space<vmem>>, vector<8x128xf32>,
    } else {
    }
    %c0 = arith.constant 0 : index
    %c0_1 = arith.constant 0 : index
    %3 = vector.load %arg2[%c0, %c0_1] : memref<8x32xf32, #tpu.memory_space<vmem>>, vector<8x32xf32>
    %c0_2 = arith.constant 0 : index
    %c0_3 = arith.constant 0 : index
    %4 = vector.load %arg3[%c0_2, %c0_3] : memref<1x32xf32, #tpu.memory_space<vmem>>, vector<1x32xf32>
    %5 = vector.broadcast %4 : vector<1x32xf32> to vector<8x32xf32>
    %6 = arith.mulf %3, %5 : vector<8x32xf32>
    %c0_4 = arith.constant 0 : index
    %c0_5 = arith.constant 0 : index
    %7 = vector.load %arg7[%c0_4, %c0_5] : memref<8x128xf32, #tpu.memory_space<vmem>>, vector<8x128xf32>
    %c0_6 = arith.constant 0 : index
    %c0_7 = arith.constant 0 : index
    %8 = vector.load %arg4[%c0_6, %c0_7] : memref<32x128xf32, #tpu.memory_space<vmem>>, vector<32x128xf32>
    %cst = arith.constant dense<0.000000e+00> : vector<8x128xf32>
    %9 = tpu.matmul %6, %8, %cst {dimension_numbers = #tpu.dot_dimension_numbers<[1], [0], [0], [1], [0, 0, 1, 1], [], []>} : vector<8x32xf32>, vector<32x128xf32>, vector<8x128xf32> -> vector<8x128xf32>
    %10 = arith.addf %7, %9 : vector<8x128xf32>
    %c0_8 = arith.constant 0 : index
    %c0_9 = arith.constant 0 : index
    %11 = vector.load %arg7[%c0_8, %c0_9] : memref<8x128xf32, #tpu.memory_space<vmem>>, vector<8x128xf32>
    tpu.vector_store %arg7[%c0_8, %c0_9], %10 {strides = array<i32>} : memref<8x128xf32, #tpu.memory_space<vmem>>, vector<8x128xf32>,
    %c0_i32_10 = arith.constant 0 : i32
    %12 = arith.cmpi eq, %arg1, %c0_i32_10 : i32
    %13 = arith.extui %12 : i1 to i32
    %c0_i32_11 = arith.constant 0 : i32
    %14 = arith.cmpi ne, %13, %c0_i32_11 : i32
    scf.if %14 {
      %c0_12 = arith.constant 0 : index
      %c0_13 = arith.constant 0 : index
      %15 = vector.load %arg7[%c0_12, %c0_13] : memref<8x128xf32, #tpu.memory_space<vmem>>, vector<8x128xf32>
      %c0_14 = arith.constant 0 : index
      %c0_15 = arith.constant 0 : index
      %16 = vector.load %arg5[%c0_14, %c0_15] : memref<1x128xf32, #tpu.memory_space<vmem>>, vector<1x128xf32>
      %17 = vector.broadcast %16 : vector<1x128xf32> to vector<8x128xf32>
      %18 = arith.addf %15, %17 : vector<8x128xf32>
      %c0_16 = arith.constant 0 : index
      %c0_17 = arith.constant 0 : index
      %19 = vector.load %arg6[%c0_16, %c0_17] : memref<8x128xf32, #tpu.memory_space<vmem>>, vector<8x128xf32>
      tpu.vector_store %arg6[%c0_16, %c0_17], %18 {strides = array<i32>} : memref<8x128xf32, #tpu.memory_space<vmem>>, vector<8x128xf32>,
    } else {
    }
    return
  }
  func.func @transform_0(%arg0: i32, %arg1: i32) -> (i32, i32) {
    %c0_i32 = arith.constant 0 : i32
    return %arg0, %arg1 : i32, i32
  }
  func.func @transform_1(%arg0: i32, %arg1: i32) -> (i32, i32) {
    %c0_i32 = arith.constant 0 : i32
    %c0_i32_0 = arith.constant 0 : i32
    return %c0_i32, %arg1 : i32, i32
  }
  func.func @transform_2(%arg0: i32, %arg1: i32) -> (i32, i32) {
    %c0_i32 = arith.constant 0 : i32
    %c0_i32_0 = arith.constant 0 : i32
    return %arg1, %c0_i32 : i32, i32
  }
  func.func @transform_3(%arg0: i32, %arg1: i32) -> (i32, i32) {
    %c0_i32 = arith.constant 0 : i32
    %c0_i32_0 = arith.constant 0 : i32
    %c0_i32_1 = arith.constant 0 : i32
    return %c0_i32, %c0_i32_0 : i32, i32
  }
  func.func @transform_4(%arg0: i32, %arg1: i32) -> (i32, i32) {
    %c0_i32 = arith.constant 0 : i32
    %c0_i32_0 = arith.constant 0 : i32
    return %arg0, %c0_i32 : i32, i32
  }
}

</mosaic_0001>

<llo_original>
// kernel: tpu_custom_call.1
$region0: #{tpu_custom_call.1}
  #allocation0 [shape = 'u32[]', space=smem, size = 0x4, offset = 0x4, fixed_abs, tag = 'smem constant byte address 0x4 - core index']
  #allocation1 [shape = 'u32[72,128]{1,0:T(1,128)}', space=vmem, size = 0x9000, scoped, tag = 'internal scratch']
  #allocation2 [shape = 'f32[8,128]{1,0:T(8,128)}', space=vmem, size = 0x1000, scoped, tag = 'scratch operand']
  %s0 = inlined_call_operand.hbm [shape: f32[8,32], index: 0, kind: input, shape index: {}]
  %s1 = inlined_call_operand.hbm [shape: f32[1,32], index: 1, kind: input, shape index: {}]
  %s2 = inlined_call_operand.hbm [shape: f32[32,128], index: 2, kind: input, shape index: {}]
  %s3 = inlined_call_operand.vmem [shape: f32[1,128], index: 3, kind: input, shape index: {}]
  %s4 = inlined_call_operand.hbm [shape: f32[8,128], index: 4, kind: output, shape index: {}]
  %s5 = sld [smem:[#allocation0]]
  $region46: #{tpu_custom_call.1} parent=0
    _
  %s7 = ssub.s32 1, %s5
  %s8 = scalar_select 0, %s7, %s5
  $region1: #{tpu_custom_call.1} parent=0
    #allocation3 [shape = 'u8[4096]{0}', space=vmem, size = 0x1000, scoped, tag = 'input window, operand 0, single buffered']
    #allocation4 [shape = 's32[1]{0}', space=sflag, size = 0x4, scoped, tag = 'scoped memory for tpu_custom_call.1']
    #allocation5 [shape = 's32[1]{0}', space=sflag, size = 0x4, scoped, tag = 'scoped memory for tpu_custom_call.1']
    #allocation6 [shape = 'u8[512]{0}', space=vmem, size = 0x400, scoped, tag = 'input window, operand 1, single buffered']
    #allocation7 [shape = 's32[1]{0}', space=sflag, size = 0x4, scoped, tag = 'scoped memory for tpu_custom_call.1']
    #allocation8 [shape = 'u8[16384]{0}', space=vmem, size = 0x4000, scoped, tag = 'input window, operand 2, single buffered']
    #allocation9 [shape = 'u8[4096]{0}', space=vmem, size = 0x1000, scoped, tag = 'output window, operand 0, single buffered']
    %9 = vsyncpa [#allocation4], 0
    %10 = vsyncpa [#allocation7], 0
    %11 = vsyncpa [#allocation5], 0
    // Predicated region
    $region2: #{tpu_custom_call.1} parent=1 // pred_check
      _
    $region3: #{tpu_custom_call.1} parent=1 // pred_check_branch
      %13 = sbr.rel (0) target = $region5
    $region4: #{tpu_custom_call.1} parent=1 // pred_region
      %15 = vsyncadd [#allocation4], 0
      %s17 = sshll.u32 %s0, 4
      %s18 = int_to_ptr.hbm [resolvable:$true] %s17
      %s19 = sshll.u32 [#allocation3], 4
      %s20 = int_to_ptr.vmem [resolvable:$true] %s19
      %22 = dma.hbm_to_vmem [thread:$0]  %s18, 128, %s20, [#allocation4]
    $region5: #{tpu_custom_call.1} parent=1 // pred_fallthru
      _
    // Predicated region
    $region6: #{tpu_custom_call.1} parent=1 // pred_check
      _
    $region7: #{tpu_custom_call.1} parent=1 // pred_check_branch
      %24 = sbr.rel (0) target = $region9
    $region8: #{tpu_custom_call.1} parent=1 // pred_region
      %26 = vsyncadd [#allocation7], 0
      %s28 = sshll.u32 %s1, 4
      %s29 = int_to_ptr.hbm [resolvable:$true] %s28
      %s30 = sshll.u32 [#allocation6], 4
      %s31 = int_to_ptr.vmem [resolvable:$true] %s30
      %33 = dma.hbm_to_vmem [thread:$0]  %s29, 16, %s31, [#allocation7]
    $region9: #{tpu_custom_call.1} parent=1 // pred_fallthru
      _
    // Predicated region
    $region10: #{tpu_custom_call.1} parent=1 // pred_check
      _
    $region11: #{tpu_custom_call.1} parent=1 // pred_check_branch
      %35 = sbr.rel (0) target = $region13
    $region12: #{tpu_custom_call.1} parent=1 // pred_region
      %37 = vsyncadd [#allocation7], 0
      %s38 = sshll.u32 %s2, 4
      %s39 = int_to_ptr.hbm [resolvable:$true] %s38
      %s40 = sshll.u32 [#allocation8], 4
      %s41 = int_to_ptr.vmem [resolvable:$true] %s40
      %46 = dma.hbm_to_vmem [thread:$0]  %s39, 512, %s41, [#allocation7], 128, 128, 8
    $region13: #{tpu_custom_call.1} parent=1 // pred_fallthru
      _
    // Predicated region
    $region14: #{tpu_custom_call.1} parent=1 // pred_check
      _
    $region15: #{tpu_custom_call.1} parent=1 // pred_check_branch
      %48 = sbr.rel (0) target = $region17
    $region16: #{tpu_custom_call.1} parent=1 // pred_region
      _
    $region17: #{tpu_custom_call.1} parent=1 // pred_fallthru
      _
    // Predicated region
    $region18: #{tpu_custom_call.1} parent=1 // pred_check
      _
    $region19: #{tpu_custom_call.1} parent=1 // pred_check_branch
      %50 = sbr.rel (0) target = $region21
    $region20: #{tpu_custom_call.1} parent=1 // pred_region
      %52 = dma.done [#allocation4], 128
    $region21: #{tpu_custom_call.1} parent=1 // pred_fallthru
      _
    // Predicated region
    $region22: #{tpu_custom_call.1} parent=1 // pred_check
      _
    $region23: #{tpu_custom_call.1} parent=1 // pred_check_branch
      %54 = sbr.rel (0) target = $region25
    $region24: #{tpu_custom_call.1} parent=1 // pred_region
      %56 = dma.done [#allocation7], 16
    $region25: #{tpu_custom_call.1} parent=1 // pred_fallthru
      _
    // Predicated region
    $region26: #{tpu_custom_call.1} parent=1 // pred_check
      _
    $region27: #{tpu_custom_call.1} parent=1 // pred_check_branch
      %58 = sbr.rel (0) target = $region29
    $region28: #{tpu_custom_call.1} parent=1 // pred_region
      %60 = dma.done [#allocation7], 512
    $region29: #{tpu_custom_call.1} parent=1 // pred_fallthru
      _
    %p61 = scmp.eq.s32.totalorder 0, 0
    // Predicated region
    $region30: #{tpu_custom_call.1} parent=1 // pred_check
      %p62 = pneg %p61
    $region31: #{tpu_custom_call.1} parent=1 // pred_check_branch
      %64 = sbr.rel (%p62) target = $region33
    $region32: #{tpu_custom_call.1} parent=1 // pred_region
      %65 = vst [vmem:[#allocation2] sm:$0xff] 0.0
    $region33: #{tpu_custom_call.1} parent=1 // pred_fallthru
      _
    %v66 = vld [vmem:[#allocation3] sm:$0xff]
    %v67 = vld [vmem:[#allocation6] sm:$0x1]
    %v69 = vperm.slane %v67, 0
    %v71 = vmul.f32 %v66, %v69
    %v72 = vld [vmem:[#allocation2] sm:$0xff]
    %v73 = vld [vmem:[#allocation8] sm:$0xff]
    %v74 = vld [vmem:[#allocation8 + $0x8] sm:$0xff]
    %v75 = vld [vmem:[#allocation8 + $0x10] sm:$0xff]
    %v76 = vld [vmem:[#allocation8 + $0x18] sm:$0xff]
    %vm77 = vcmask 261120
    %v79 = vsel %vm77, %v71, 0
    %81 = vmatpush.msra.mxu0 0.0
    %82 = vmatpush.msra.mxu0 0.0
    %83 = vmatpush.msra.mxu0 0.0
    %84 = vmatpush.msra.mxu0 0.0
    %85 = vmatpush.msra.mxu0 0.0
    %86 = vmatpush.msra.mxu0 0.0
    %87 = vmatpush.msra.mxu0 0.0
    %88 = vmatpush.msra.mxu0 0.0
    %89 = vmatpush.msra.mxu0 0.0
    %90 = vmatpush.msra.mxu0 0.0
    %91 = vmatpush.msra.mxu0 0.0
    %92 = vmatpush.msra.mxu0 0.0
    %93 = vmatpush.msra.mxu0 %v76
    %94 = vmatpush.msra.mxu0 %v75
    %95 = vmatpush.msra.mxu0 %v74
    %96 = vmatpush.msra.mxu0 %v73
    %97 = vmatmul.f32.gmra.mxu0 %v79
    %v98 = vpop.f32.mrf.mxu0
    %v99 = vadd.f32 0.0, %v98
    %100 = vdwg.mxu0
    %v101 = vadd.f32 %v72, %v99
    %102 = vst [vmem:[#allocation2] sm:$0xff] %v101
    // Predicated region
    $region34: #{tpu_custom_call.1} parent=1 // pred_check
      %p103 = pneg %p61
    $region35: #{tpu_custom_call.1} parent=1 // pred_check_branch
      %105 = sbr.rel (%p103) target = $region37
    $region36: #{tpu_custom_call.1} parent=1 // pred_region
      %v106 = vld [vmem:[#allocation2] sm:$0xff]
      %v107 = vld [vmem:[%s3] sm:$0x1]
      %v109 = vperm.slane %v107, 0
      %v111 = vadd.f32 %v106, %v109
      %112 = vst [vmem:[#allocation9] sm:$0xff] %v111
    $region37: #{tpu_custom_call.1} parent=1 // pred_fallthru
      _
    // Predicated region
    $region38: #{tpu_custom_call.1} parent=1 // pred_check
      _
    $region39: #{tpu_custom_call.1} parent=1 // pred_check_branch
      %114 = sbr.rel (0) target = $region41
    $region40: #{tpu_custom_call.1} parent=1 // pred_region
      %116 = vsyncadd [#allocation5], 0
      %s118 = sshll.u32 [#allocation9], 4
      %s119 = int_to_ptr.vmem [resolvable:$true] %s118
      %s120 = sshll.u32 %s4, 4
      %s121 = int_to_ptr.hbm [resolvable:$true] %s120
      %123 = dma.vmem_to_hbm [thread:$0]  %s119, 128, %s121, [#allocation5]
    $region41: #{tpu_custom_call.1} parent=1 // pred_fallthru
      _
    // Predicated region
    $region42: #{tpu_custom_call.1} parent=1 // pred_check
      _
    $region43: #{tpu_custom_call.1} parent=1 // pred_check_branch
      %125 = sbr.rel (0) target = $region45
    $region44: #{tpu_custom_call.1} parent=1 // pred_region
      %127 = dma.done [#allocation5], 128
    $region45: #{tpu_custom_call.1} parent=1 // pred_fallthru
      _
    %128 = vsyncpa [#allocation4], 1
    %129 = vsyncpa [#allocation7], 1
    %130 = vsyncpa [#allocation5], 1

// kernel: tpu_custom_call.1
$region0: #{tpu_custom_call.1}
  #allocation0 [shape = 'u32[]', space=smem, size = 0x4, offset = 0x4, fixed_abs, tag = 'smem constant byte address 0x4 - core index']
  #allocation1 [shape = 'u32[72,128]{1,0:T(1,128)}', space=vmem, size = 0x9000, scoped, tag = 'internal scratch']
  #allocation2 [shape = 'f32[8,128]{1,0:T(8,128)}', space=vmem, size = 0x1000, scoped, tag = 'scratch operand']
  %s0 = inlined_call_operand.hbm [shape: f32[8,32], index: 0, kind: input, shape index: {}]
  %s1 = inlined_call_operand.hbm [shape: f32[1,32], index: 1, kind: input, shape index: {}]
  %s2 = inlined_call_operand.hbm [shape: f32[32,128], index: 2, kind: input, shape index: {}]
  %s3 = inlined_call_operand.vmem [shape: f32[1,128], index: 3, kind: input, shape index: {}]
  %s4 = inlined_call_operand.hbm [shape: f32[8,128], index: 4, kind: output, shape index: {}]
  %s5 = sld [smem:[#allocation0]]
  $region46: #{tpu_custom_call.1} parent=0
    _
  %s7 = ssub.s32 1, %s5
  %s8 = scalar_select 0, %s7, %s5
  $region1: #{tpu_custom_call.1} parent=0
    #allocation3 [shape = 'u8[4096]{0}', space=vmem, size = 0x1000, scoped, tag = 'input window, operand 0, single buffered']
    #allocation4 [shape = 's32[1]{0}', space=sflag, size = 0x4, scoped, tag = 'scoped memory for tpu_custom_call.1']
    #allocation5 [shape = 's32[1]{0}', space=sflag, size = 0x4, scoped, tag = 'scoped memory for tpu_custom_call.1']
    #allocation6 [shape = 'u8[512]{0}', space=vmem, size = 0x400, scoped, tag = 'input window, operand 1, single buffered']
    #allocation7 [shape = 's32[1]{0}', space=sflag, size = 0x4, scoped, tag = 'scoped memory for tpu_custom_call.1']
    #allocation8 [shape = 'u8[16384]{0}', space=vmem, size = 0x4000, scoped, tag = 'input window, operand 2, single buffered']
    #allocation9 [shape = 'u8[4096]{0}', space=vmem, size = 0x1000, scoped, tag = 'output window, operand 0, single buffered']
    %9 = vsyncpa [#allocation4], 0
    %10 = vsyncpa [#allocation7], 0
    %11 = vsyncpa [#allocation5], 0
    // Predicated region
    $region2: #{tpu_custom_call.1} parent=1 // pred_check
      _
    $region3: #{tpu_custom_call.1} parent=1 // pred_check_branch
      %13 = sbr.rel (0) target = $region5
    $region4: #{tpu_custom_call.1} parent=1 // pred_region
      %15 = vsyncadd [#allocation4], 0
      %s17 = sshll.u32 %s0, 4
      %s18 = int_to_ptr.hbm [resolvable:$true] %s17
      %s19 = sshll.u32 [#allocation3], 4
      %s20 = int_to_ptr.vmem [resolvable:$true] %s19
      %22 = dma.hbm_to_vmem [thread:$0]  %s18, 128, %s20, [#allocation4]
    $region5: #{tpu_custom_call.1} parent=1 // pred_fallthru
      _
    // Predicated region
    $region6: #{tpu_custom_call.1} parent=1 // pred_check
      _
    $region7: #{tpu_custom_call.1} parent=1 // pred_check_branch
      %24 = sbr.rel (0) target = $region9
    $region8: #{tpu_custom_call.1} parent=1 // pred_region
      %26 = vsyncadd [#allocation7], 0
      %s28 = sshll.u32 %s1, 4
      %s29 = int_to_ptr.hbm [resolvable:$true] %s28
      %s30 = sshll.u32 [#allocation6], 4
      %s31 = int_to_ptr.vmem [resolvable:$true] %s30
      %33 = dma.hbm_to_vmem [thread:$0]  %s29, 16, %s31, [#allocation7]
    $region9: #{tpu_custom_call.1} parent=1 // pred_fallthru
      _
    // Predicated region
    $region10: #{tpu_custom_call.1} parent=1 // pred_check
      _
    $region11: #{tpu_custom_call.1} parent=1 // pred_check_branch
      %35 = sbr.rel (0) target = $region13
    $region12: #{tpu_custom_call.1} parent=1 // pred_region
      %37 = vsyncadd [#allocation7], 0
      %s38 = sshll.u32 %s2, 4
      %s39 = int_to_ptr.hbm [resolvable:$true] %s38
      %s40 = sshll.u32 [#allocation8], 4
      %s41 = int_to_ptr.vmem [resolvable:$true] %s40
      %46 = dma.hbm_to_vmem [thread:$0]  %s39, 512, %s41, [#allocation7], 128, 128, 8
    $region13: #{tpu_custom_call.1} parent=1 // pred_fallthru
      _
    // Predicated region
    $region14: #{tpu_custom_call.1} parent=1 // pred_check
      _
    $region15: #{tpu_custom_call.1} parent=1 // pred_check_branch
      %48 = sbr.rel (0) target = $region17
    $region16: #{tpu_custom_call.1} parent=1 // pred_region
      _
    $region17: #{tpu_custom_call.1} parent=1 // pred_fallthru
      _
    // Predicated region
    $region18: #{tpu_custom_call.1} parent=1 // pred_check
      _
    $region19: #{tpu_custom_call.1} parent=1 // pred_check_branch
      %50 = sbr.rel (0) target = $region21
    $region20: #{tpu_custom_call.1} parent=1 // pred_region
      %52 = dma.done [#allocation4], 128
    $region21: #{tpu_custom_call.1} parent=1 // pred_fallthru
      _
    // Predicated region
    $region22: #{tpu_custom_call.1} parent=1 // pred_check
      _
    $region23: #{tpu_custom_call.1} parent=1 // pred_check_branch
      %54 = sbr.rel (0) target = $region25
    $region24: #{tpu_custom_call.1} parent=1 // pred_region
      %56 = dma.done [#allocation7], 16
    $region25: #{tpu_custom_call.1} parent=1 // pred_fallthru
      _
    // Predicated region
    $region26: #{tpu_custom_call.1} parent=1 // pred_check
      _
    $region27: #{tpu_custom_call.1} parent=1 // pred_check_branch
      %58 = sbr.rel (0) target = $region29
    $region28: #{tpu_custom_call.1} parent=1 // pred_region
      %60 = dma.done [#allocation7], 512
    $region29: #{tpu_custom_call.1} parent=1 // pred_fallthru
      _
    %p61 = scmp.eq.s32.totalorder 0, 0
    // Predicated region
    $region30: #{tpu_custom_call.1} parent=1 // pred_check
      %p62 = pneg %p61
    $region31: #{tpu_custom_call.1} parent=1 // pred_check_branch
      %64 = sbr.rel (%p62) target = $region33
    $region32: #{tpu_custom_call.1} parent=1 // pred_region
      %65 = vst [vmem:[#allocation2] sm:$0xff] 0.0
    $region33: #{tpu_custom_call.1} parent=1 // pred_fallthru
      _
    %v66 = vld [vmem:[#allocation3] sm:$0xff]
    %v67 = vld [vmem:[#allocation6] sm:$0x1]
    %v69 = vperm.slane %v67, 0
    %v71 = vmul.f32 %v66, %v69
    %v72 = vld [vmem:[#allocation2] sm:$0xff]
    %v73 = vld [vmem:[#allocation8] sm:$0xff]
    %v74 = vld [vmem:[#allocation8 + $0x8] sm:$0xff]
    %v75 = vld [vmem:[#allocation8 + $0x10] sm:$0xff]
    %v76 = vld [vmem:[#allocation8 + $0x18] sm:$0xff]
    %vm77 = vcmask 261120
    %v79 = vsel %vm77, %v71, 0
    %81 = vmatpush.msra.mxu0 0.0
    %82 = vmatpush.msra.mxu0 0.0
    %83 = vmatpush.msra.mxu0 0.0
    %84 = vmatpush.msra.mxu0 0.0
    %85 = vmatpush.msra.mxu0 0.0
    %86 = vmatpush.msra.mxu0 0.0
    %87 = vmatpush.msra.mxu0 0.0
    %88 = vmatpush.msra.mxu0 0.0
    %89 = vmatpush.msra.mxu0 0.0
    %90 = vmatpush.msra.mxu0 0.0
    %91 = vmatpush.msra.mxu0 0.0
    %92 = vmatpush.msra.mxu0 0.0
    %93 = vmatpush.msra.mxu0 %v76
    %94 = vmatpush.msra.mxu0 %v75
    %95 = vmatpush.msra.mxu0 %v74
    %96 = vmatpush.msra.mxu0 %v73
    %97 = vmatmul.f32.gmra.mxu0 %v79
    %v98 = vpop.f32.mrf.mxu0
    %v99 = vadd.f32 0.0, %v98
    %100 = vdwg.mxu0
    %v101 = vadd.f32 %v72, %v99
    %102 = vst [vmem:[#allocation2] sm:$0xff] %v101
    // Predicated region
    $region34: #{tpu_custom_call.1} parent=1 // pred_check
      %p103 = pneg %p61
    $region35: #{tpu_custom_call.1} parent=1 // pred_check_branch
      %105 = sbr.rel (%p103) target = $region37
    $region36: #{tpu_custom_call.1} parent=1 // pred_region
      %v106 = vld [vmem:[#allocation2] sm:$0xff]
      %v107 = vld [vmem:[%s3] sm:$0x1]
      %v109 = vperm.slane %v107, 0
      %v111 = vadd.f32 %v106, %v109
      %112 = vst [vmem:[#allocation9] sm:$0xff] %v111
    $region37: #{tpu_custom_call.1} parent=1 // pred_fallthru
      _
    // Predicated region
    $region38: #{tpu_custom_call.1} parent=1 // pred_check
      _
    $region39: #{tpu_custom_call.1} parent=1 // pred_check_branch
      %114 = sbr.rel (0) target = $region41
    $region40: #{tpu_custom_call.1} parent=1 // pred_region
      %116 = vsyncadd [#allocation5], 0
      %s118 = sshll.u32 [#allocation9], 4
      %s119 = int_to_ptr.vmem [resolvable:$true] %s118
      %s120 = sshll.u32 %s4, 4
      %s121 = int_to_ptr.hbm [resolvable:$true] %s120
      %123 = dma.vmem_to_hbm [thread:$0]  %s119, 128, %s121, [#allocation5]
    $region41: #{tpu_custom_call.1} parent=1 // pred_fallthru
      _
    // Predicated region
    $region42: #{tpu_custom_call.1} parent=1 // pred_check
      _
    $region43: #{tpu_custom_call.1} parent=1 // pred_check_branch
      %125 = sbr.rel (0) target = $region45
    $region44: #{tpu_custom_call.1} parent=1 // pred_region
      %127 = dma.done [#allocation5], 128
    $region45: #{tpu_custom_call.1} parent=1 // pred_fallthru
      _
    %128 = vsyncpa [#allocation4], 1
    %129 = vsyncpa [#allocation7], 1
    %130 = vsyncpa [#allocation5], 1

</llo_original>
